<compile_context>
chip_gen: v7x
topology: tpu7x:2x2x1
jax: 0.10.0
libtpu: 0.0.40
codegen_flags: <defaults>
</compile_context>

<pallas_src>
import functools

import jax
import jax.numpy as jnp
from jax.experimental import pallas as pl
from jax.experimental.pallas import tpu as pltpu


def _round_up(x, m):
    return (x + m - 1) // m * m


def _vmem_tile_bytes(rows, cols, itemsize=4):
    # VMEM footprint of a 2-D tile after (8, 128) sublane/lane padding.
    return _round_up(max(rows, 1), 8) * _round_up(max(cols, 1), 128) * itemsize


def _vmem_limit_bytes():
    phys = 64 * 1024 * 1024                       # conservative default (v7x per-TC)
    try:
        phys = int(pltpu.get_tpu_info().vmem_capacity_bytes)
    except Exception:
        pass
    # ~75% of physical, capped; leaves headroom for Mosaic-internal scratch.
    # v5e/v6e (128 MiB) -> 96 MiB, v7x (64 MiB) -> 48 MiB.
    return max(32 * 1024 * 1024, min((phys * 3) // 4, 110 * 1024 * 1024))


def _pick_tb(B):
    # Batch tile: exact for tiny B, otherwise a multiple of 8 capped at 128,
    # reduced if needed so the parallel batch axis has >= 2 blocks (megacore).
    if B <= 8:
        return B
    tb = min(128, 8 * (B // 8))
    if -(-B // tb) < 2:
        half = 8 * ((B // 2) // 8)
        if half >= 8:
            tb = half
    return tb


def _pick_ts(S_eff, TB, D_eff, vmem_limit, weights_vmem):
    # Largest multiple-of-8 sequence tile whose lane-padded, double-buffered
    # footprint fits the remaining VMEM budget.
    padded_d = _round_up(D_eff, 128)
    feat_row_bytes = max(TB, 1) * padded_d * 4
    acc_vmem = _round_up(TB, 8) * padded_d * 4            # (TB, D_eff) scratch
    small_io = 4 * _vmem_tile_bytes(TB, 4)                # window in + out, 2 bufs
    slack = 2 * 1024 * 1024
    avail = vmem_limit - weights_vmem - acc_vmem - small_io - slack
    # Features are double-buffered by the pipeline; enforce a >=8-row floor.
    feat_per_buf = max(avail // 2, 8 * feat_row_bytes)
    max_rows = max(8, feat_per_buf // feat_row_bytes)
    if S_eff <= 8:
        return S_eff                                       # single exact tile
    return max(8, min(8 * (max_rows // 8), 8 * (S_eff // 8)))


def window_optimizer_kernel(feat_ref, win_ref, w1a_ref, w1b_ref, b1_ref,
                            w2_ref, b2_ref, out_ref, acc_ref, *,
                            inv_s, tail_rows):
    # feat_ref: (TB, TS, D_eff)   win_ref/out_ref: (TB, 4)
    # w1a_ref: (D_eff, H)  (= W1[:D] tiled F times when lane-folded)
    # w1b_ref: (4, H)   b1_ref: (1, H)   w2_ref: (H, 4)   b2_ref: (1, 4)
    # acc_ref: (TB, D_eff) f32 running sum over the (folded) sequence axis.
    s = pl.program_id(1)
    last = pl.num_programs(1) - 1

    @pl.when(s == 0)
    def _init():
        acc_ref[...] = jnp.zeros_like(acc_ref)

    if tail_rows == 0:
        # Every sequence tile is full: pure streamed vreg-add reduction.
        acc_ref[...] += jnp.sum(feat_ref[...], axis=1)
    else:
        @pl.when(s != last)
        def _steady():
            acc_ref[...] += jnp.sum(feat_ref[...], axis=1)

        @pl.when(s == last)
        def _tail():
            # Partial last tile: zero the out-of-range rows before reducing.
            ids = jax.lax.broadcasted_iota(jnp.int32, feat_ref.shape, 1)
            feat = jnp.where(ids < tail_rows, feat_ref[...], 0.0)
            acc_ref[...] += jnp.sum(feat, axis=1)

    @pl.when(s == last)
    def _epilogue():
        win = win_ref[...]                                             # (TB, 4)
        # mean(features) @ W1a  ==  (1/S) * (acc @ W1a_rep); fold absorbed in W1a_rep.
        h = (jnp.dot(acc_ref[...], w1a_ref[...],
                     preferred_element_type=jnp.float32) * inv_s
             + b1_ref[...])                                            # (TB, H)
        # win @ W1b (K=4) as 4 VPU broadcast FMAs instead of a padded MXU matmul.
        for k in range(4):
            h = h + win[:, k:k + 1] * w1b_ref[k:k + 1, :]
        h = jnp.maximum(h, 0.0)                                        # ReLU
        d = (jnp.dot(h, w2_ref[...], preferred_element_type=jnp.float32)
             + b2_ref[...])                                            # (TB, 4)
        out_ref[...] = jax.nn.sigmoid(win + jnp.tanh(d) * 0.1)


def window_optimizer_forward(features, current_window, params):
    """features: [B, S, D] f32, current_window: [B, 4] f32 -> [B, 4] f32."""
    B, S, D = features.shape
    w1a, w1b, b1, w2, b2 = params
    H = w1a.shape[1]

    # Lane folding for small D: stream lane-dense [B, S//F, F*D] tiles.
    fold = 1
    if D < 128 and 128 % D == 0 and S % (128 // D) == 0:
        fold = 128 // D
    D_eff = D * fold
    S_eff = S // fold
    feats = features.reshape(B, S_eff, D_eff) if fold > 1 else features
    w1a_rep = jnp.concatenate([w1a] * fold, axis=0) if fold > 1 else w1a

    TB = _pick_tb(B)
    vmem_limit = _vmem_limit_bytes()
    # Resident weights, counted as double-buffered (conservative).
    weights_vmem = 2 * (_vmem_tile_bytes(D_eff, H) + _vmem_tile_bytes(4, H)
                        + _vmem_tile_bytes(1, H) + _vmem_tile_bytes(H, 4)
                        + _vmem_tile_bytes(1, 4))
    TS = _pick_ts(S_eff, TB, D_eff, vmem_limit, weights_vmem)
    grid = (pl.cdiv(B, TB), pl.cdiv(S_eff, TS))
    tail_rows = S_eff % TS

    kernel = functools.partial(window_optimizer_kernel,
                               inv_s=1.0 / S, tail_rows=tail_rows)

    cost = pl.CostEstimate(
        flops=B * S * D + 2 * B * (D * H + 4 * H + H * 4) + 12 * B,
        transcendentals=8 * B,
        bytes_accessed=B * S * D * 4 + 2 * B * 4 * 4
        + 4 * (D_eff * H + 4 * H + H + H * 4 + 4),
    )

    return pl.pallas_call(
        kernel,
        out_shape=jax.ShapeDtypeStruct((B, 4), jnp.float32),
        grid_spec=pltpu.PrefetchScalarGridSpec(
            num_scalar_prefetch=0,
            grid=grid,
            in_specs=[
                pl.BlockSpec((TB, TS, D_eff), lambda b, s: (b, s, 0)),  # features
                pl.BlockSpec((TB, 4), lambda b, s: (b, 0)),             # window
                pl.BlockSpec((D_eff, H), lambda b, s: (0, 0)),          # W1a (resident)
                pl.BlockSpec((4, H), lambda b, s: (0, 0)),              # W1b (resident)
                pl.BlockSpec((1, H), lambda b, s: (0, 0)),              # b1  (resident)
                pl.BlockSpec((H, 4), lambda b, s: (0, 0)),              # W2  (resident)
                pl.BlockSpec((1, 4), lambda b, s: (0, 0)),              # b2  (resident)
            ],
            # s-invariant output block: written once per batch block (epilogue).
            out_specs=pl.BlockSpec((TB, 4), lambda b, s: (b, 0)),
            scratch_shapes=[pltpu.VMEM((TB, D_eff), jnp.float32)],
        ),
        compiler_params=pltpu.CompilerParams(
            dimension_semantics=("parallel", "arbitrary"),
            vmem_limit_bytes=vmem_limit,
        ),
        cost_estimate=cost,
    )(feats, current_window, w1a_rep, w1b, b1, w2, b2)


def init_params(d_model, key):
    """Deterministic init matching nn.Linear(d_model+4, d_model//2) / Linear(d_model//2, 4)."""
    H = d_model // 2
    k1, k2, k3, k4 = jax.random.split(key, 4)
    bound1 = 1.0 / jnp.sqrt(d_model + 4)
    bound2 = 1.0 / jnp.sqrt(H)
    w1 = jax.random.uniform(k1, (d_model + 4, H), jnp.float32, -bound1, bound1)
    b1 = jax.random.uniform(k2, (1, H), jnp.float32, -bound1, bound1)
    w2 = jax.random.uniform(k3, (H, 4), jnp.float32, -bound2, bound2)
    b2 = jax.random.uniform(k4, (1, 4), jnp.float32, -bound2, bound2)
    w1a = w1[:d_model, :]
    w1b = w1[d_model:, :]
    return (w1a, w1b, b1, w2, b2)


def reference_forward(features, current_window, params):
    """Pure-JAX reference mirroring the (effective) PyTorch forward."""
    w1a, w1b, b1, w2, b2 = params
    favg = jnp.mean(features, axis=1)
    x = jnp.concatenate([favg, current_window], axis=-1)
    w1 = jnp.concatenate([w1a, w1b], axis=0)
    h = jnp.maximum(x @ w1 + b1, 0.0)
    d = h @ w2 + b2
    delta = jnp.tanh(d) * 0.1
    return jax.nn.sigmoid(current_window + delta)


if __name__ == "__main__":
    B, S, D = 2, 8, 32   # batch=2, seq=8, d_model=32
    key = jax.random.PRNGKey(0)
    kf, kw, kp = jax.random.split(key, 3)

    features = jax.random.normal(kf, (B, S, D), jnp.float32)
    current_window = jax.random.normal(kw, (B, 4), jnp.float32)
    params = init_params(D, kp)

    out = window_optimizer_forward(features, current_window, params)
    out = jax.block_until_ready(out)

    ref = reference_forward(features, current_window, params)
    assert out.shape == (B, 4)
    assert jnp.allclose(out, ref, atol=1e-5, rtol=1e-5)

    print("KERNEL_OK")
</pallas_src>

<mosaic_0001>
module attributes {stable_mosaic.version = 11 : i64} {
  func.func @window_optimizer_kernel(%arg0: i32, %arg1: i32, %arg2: memref<2x2x128xf32, #tpu.memory_space<vmem>>, %arg3: memref<2x4xf32, #tpu.memory_space<vmem>>, %arg4: memref<128x16xf32, #tpu.memory_space<vmem>>, %arg5: memref<4x16xf32, #tpu.memory_space<vmem>>, %arg6: memref<1x16xf32, #tpu.memory_space<vmem>>, %arg7: memref<16x4xf32, #tpu.memory_space<vmem>>, %arg8: memref<1x4xf32, #tpu.memory_space<vmem>>, %arg9: memref<2x4xf32, #tpu.memory_space<vmem>>, %arg10: memref<2x128xf32, #tpu.memory_space<vmem>>) attributes {dimension_semantics = [#tpu.dimension_semantics<parallel>, #tpu.dimension_semantics<arbitrary>], iteration_bounds = array<i64: 1, 1>, scalar_prefetch = 0 : i64, scratch_operands = 1 : i64, tpu.core_type = #tpu.core_type<tc>, window_params = [{transform_indices = @transform_0, window_bounds = array<i64: 2, 2, 128>}, {transform_indices = @transform_1, window_bounds = array<i64: 2, 4>}, {pipeline_mode = #tpu.pipeline_mode<synchronous>, transform_indices = @transform_2, window_bounds = array<i64: 128, 16>}, {pipeline_mode = #tpu.pipeline_mode<synchronous>, transform_indices = @transform_3, window_bounds = array<i64: 4, 16>}, {pipeline_mode = #tpu.pipeline_mode<synchronous>, transform_indices = @transform_4, window_bounds = array<i64: 1, 16>}, {pipeline_mode = #tpu.pipeline_mode<synchronous>, transform_indices = @transform_5, window_bounds = array<i64: 16, 4>}, {pipeline_mode = #tpu.pipeline_mode<synchronous>, transform_indices = @transform_6, window_bounds = array<i64: 1, 4>}, {transform_indices = @transform_7, window_bounds = array<i64: 2, 4>}]} {
    %c0_i32 = arith.constant 0 : i32
    %0 = arith.cmpi eq, %arg1, %c0_i32 : i32
    %1 = arith.extui %0 : i1 to i32
    %c0_i32_0 = arith.constant 0 : i32
    %2 = arith.cmpi ne, %1, %c0_i32_0 : i32
    scf.if %2 {
      %cst_9 = arith.constant 0.000000e+00 : f32
      %11 = vector.broadcast %cst_9 : f32 to vector<2x128xf32>
      %c0_10 = arith.constant 0 : index
      %c0_11 = arith.constant 0 : index
      %12 = vector.load %arg10[%c0_10, %c0_11] : memref<2x128xf32, #tpu.memory_space<vmem>>, vector<2x128xf32>
      tpu.vector_store %arg10[%c0_10, %c0_11], %11 {strides = array<i32>} : memref<2x128xf32, #tpu.memory_space<vmem>>, vector<2x128xf32>,
    } else {
    }
    %c0 = arith.constant 0 : index
    %c0_1 = arith.constant 0 : index
    %3 = vector.load %arg10[%c0, %c0_1] : memref<2x128xf32, #tpu.memory_space<vmem>>, vector<2x128xf32>
    %c0_2 = arith.constant 0 : index
    %c0_3 = arith.constant 0 : index
    %c0_4 = arith.constant 0 : index
    %4 = vector.load %arg2[%c0_2, %c0_3, %c0_4] : memref<2x2x128xf32, #tpu.memory_space<vmem>>, vector<2x2x128xf32>
    %cst = arith.constant dense<0.000000e+00> : vector<2x128xf32>
    %5 = vector.multi_reduction <add>, %4, %cst [1] : vector<2x2x128xf32> to vector<2x128xf32>
    %6 = arith.addf %3, %5 : vector<2x128xf32>
    %c0_5 = arith.constant 0 : index
    %c0_6 = arith.constant 0 : index
    %7 = vector.load %arg10[%c0_5, %c0_6] : memref<2x128xf32, #tpu.memory_space<vmem>>, vector<2x128xf32>
    tpu.vector_store %arg10[%c0_5, %c0_6], %6 {strides = array<i32>} : memref<2x128xf32, #tpu.memory_space<vmem>>, vector<2x128xf32>,
    %c0_i32_7 = arith.constant 0 : i32
    %8 = arith.cmpi eq, %arg1, %c0_i32_7 : i32
    %9 = arith.extui %8 : i1 to i32
    %c0_i32_8 = arith.constant 0 : i32
    %10 = arith.cmpi ne, %9, %c0_i32_8 : i32
    scf.if %10 {
      %c0_9 = arith.constant 0 : index
      %c0_10 = arith.constant 0 : index
      %11 = vector.load %arg3[%c0_9, %c0_10] : memref<2x4xf32, #tpu.memory_space<vmem>>, vector<2x4xf32>
      %c0_11 = arith.constant 0 : index
      %c0_12 = arith.constant 0 : index
      %12 = vector.load %arg10[%c0_11, %c0_12] : memref<2x128xf32, #tpu.memory_space<vmem>>, vector<2x128xf32>
      %c0_13 = arith.constant 0 : index
      %c0_14 = arith.constant 0 : index
      %13 = vector.load %arg4[%c0_13, %c0_14] : memref<128x16xf32, #tpu.memory_space<vmem>>, vector<128x16xf32>
      %cst_15 = arith.constant dense<0.000000e+00> : vector<2x16xf32>
      %14 = tpu.matmul %12, %13, %cst_15 {dimension_numbers = #tpu.dot_dimension_numbers<[1], [0], [0], [1], [0, 0, 1, 1], [], []>} : vector<2x128xf32>, vector<128x16xf32>, vector<2x16xf32> -> vector<2x16xf32>
      %cst_16 = arith.constant 1.250000e-01 : f32
      %15 = vector.broadcast %cst_16 : f32 to vector<2x16xf32>
      %16 = arith.mulf %14, %15 : vector<2x16xf32>
      %c0_17 = arith.constant 0 : index
      %c0_18 = arith.constant 0 : index
      %17 = vector.load %arg6[%c0_17, %c0_18] : memref<1x16xf32, #tpu.memory_space<vmem>>, vector<1x16xf32>
      %18 = vector.broadcast %17 : vector<1x16xf32> to vector<2x16xf32>
      %19 = arith.addf %16, %18 : vector<2x16xf32>
      %20 = vector.extract_strided_slice %11 {offsets = [0, 0], sizes = [2, 1], strides = [1, 1]} : vector<2x4xf32> to vector<2x1xf32>
      %c0_19 = arith.constant 0 : index
      %c0_20 = arith.constant 0 : index
      %21 = vector.load %arg5[%c0_19, %c0_20] : memref<4x16xf32, #tpu.memory_space<vmem>>, vector<1x16xf32>
      %22 = vector.broadcast %20 : vector<2x1xf32> to vector<2x16xf32>
      %23 = vector.broadcast %21 : vector<1x16xf32> to vector<2x16xf32>
      %24 = arith.mulf %22, %23 : vector<2x16xf32>
      %25 = arith.addf %19, %24 : vector<2x16xf32>
      %26 = vector.extract_strided_slice %11 {offsets = [0, 1], sizes = [2, 1], strides = [1, 1]} : vector<2x4xf32> to vector<2x1xf32>
      %c1 = arith.constant 1 : index
      %c0_21 = arith.constant 0 : index
      %27 = vector.load %arg5[%c1, %c0_21] : memref<4x16xf32, #tpu.memory_space<vmem>>, vector<1x16xf32>
      %28 = vector.broadcast %26 : vector<2x1xf32> to vector<2x16xf32>
      %29 = vector.broadcast %27 : vector<1x16xf32> to vector<2x16xf32>
      %30 = arith.mulf %28, %29 : vector<2x16xf32>
      %31 = arith.addf %25, %30 : vector<2x16xf32>
      %32 = vector.extract_strided_slice %11 {offsets = [0, 2], sizes = [2, 1], strides = [1, 1]} : vector<2x4xf32> to vector<2x1xf32>
      %c2 = arith.constant 2 : index
      %c0_22 = arith.constant 0 : index
      %33 = vector.load %arg5[%c2, %c0_22] : memref<4x16xf32, #tpu.memory_space<vmem>>, vector<1x16xf32>
      %34 = vector.broadcast %32 : vector<2x1xf32> to vector<2x16xf32>
      %35 = vector.broadcast %33 : vector<1x16xf32> to vector<2x16xf32>
      %36 = arith.mulf %34, %35 : vector<2x16xf32>
      %37 = arith.addf %31, %36 : vector<2x16xf32>
      %38 = vector.extract_strided_slice %11 {offsets = [0, 3], sizes = [2, 1], strides = [1, 1]} : vector<2x4xf32> to vector<2x1xf32>
      %c3 = arith.constant 3 : index
      %c0_23 = arith.constant 0 : index
      %39 = vector.load %arg5[%c3, %c0_23] : memref<4x16xf32, #tpu.memory_space<vmem>>, vector<1x16xf32>
      %40 = vector.broadcast %38 : vector<2x1xf32> to vector<2x16xf32>
      %41 = vector.broadcast %39 : vector<1x16xf32> to vector<2x16xf32>
      %42 = arith.mulf %40, %41 : vector<2x16xf32>
      %43 = arith.addf %37, %42 : vector<2x16xf32>
      %cst_24 = arith.constant 0.000000e+00 : f32
      %44 = vector.broadcast %cst_24 : f32 to vector<2x16xf32>
      %45 = arith.maximumf %43, %44 : vector<2x16xf32>
      %c0_25 = arith.constant 0 : index
      %c0_26 = arith.constant 0 : index
      %46 = vector.load %arg7[%c0_25, %c0_26] : memref<16x4xf32, #tpu.memory_space<vmem>>, vector<16x4xf32>
      %cst_27 = arith.constant dense<0.000000e+00> : vector<2x4xf32>
      %47 = tpu.matmul %45, %46, %cst_27 {dimension_numbers = #tpu.dot_dimension_numbers<[1], [0], [0], [1], [0, 0, 1, 1], [], []>} : vector<2x16xf32>, vector<16x4xf32>, vector<2x4xf32> -> vector<2x4xf32>
      %c0_28 = arith.constant 0 : index
      %c0_29 = arith.constant 0 : index
      %48 = vector.load %arg8[%c0_28, %c0_29] : memref<1x4xf32, #tpu.memory_space<vmem>>, vector<1x4xf32>
      %49 = vector.broadcast %48 : vector<1x4xf32> to vector<2x4xf32>
      %50 = arith.addf %47, %49 : vector<2x4xf32>
      %51 = math.tanh %50 : vector<2x4xf32>
      %cst_30 = arith.constant 1.000000e-01 : f32
      %52 = vector.broadcast %cst_30 : f32 to vector<2x4xf32>
      %53 = arith.mulf %51, %52 : vector<2x4xf32>
      %54 = arith.addf %11, %53 : vector<2x4xf32>
      %55 = arith.negf %54 : vector<2x4xf32>
      %56 = math.exp %55 : vector<2x4xf32>
      %cst_31 = arith.constant 1.000000e+00 : f32
      %57 = vector.broadcast %cst_31 : f32 to vector<2x4xf32>
      %58 = arith.addf %57, %56 : vector<2x4xf32>
      %59 = arith.divf %57, %58 : vector<2x4xf32>
      %c0_32 = arith.constant 0 : index
      %c0_33 = arith.constant 0 : index
      %60 = vector.load %arg9[%c0_32, %c0_33] : memref<2x4xf32, #tpu.memory_space<vmem>>, vector<2x4xf32>
      tpu.vector_store %arg9[%c0_32, %c0_33], %59 {strides = array<i32>} : memref<2x4xf32, #tpu.memory_space<vmem>>, vector<2x4xf32>,
    } else {
    }
    return
  }
  func.func @transform_0(%arg0: i32, %arg1: i32) -> (i32, i32, i32) {
    %c0_i32 = arith.constant 0 : i32
    %c0_i32_0 = arith.constant 0 : i32
    return %arg0, %arg1, %c0_i32 : i32, i32, i32
  }
  func.func @transform_1(%arg0: i32, %arg1: i32) -> (i32, i32) {
    %c0_i32 = arith.constant 0 : i32
    %c0_i32_0 = arith.constant 0 : i32
    return %arg0, %c0_i32 : i32, i32
  }
  func.func @transform_2(%arg0: i32, %arg1: i32) -> (i32, i32) {
    %c0_i32 = arith.constant 0 : i32
    %c0_i32_0 = arith.constant 0 : i32
    %c0_i32_1 = arith.constant 0 : i32
    return %c0_i32, %c0_i32_0 : i32, i32
  }
  func.func @transform_3(%arg0: i32, %arg1: i32) -> (i32, i32) {
    %c0_i32 = arith.constant 0 : i32
    %c0_i32_0 = arith.constant 0 : i32
    %c0_i32_1 = arith.constant 0 : i32
    return %c0_i32, %c0_i32_0 : i32, i32
  }
  func.func @transform_4(%arg0: i32, %arg1: i32) -> (i32, i32) {
    %c0_i32 = arith.constant 0 : i32
    %c0_i32_0 = arith.constant 0 : i32
    %c0_i32_1 = arith.constant 0 : i32
    return %c0_i32, %c0_i32_0 : i32, i32
  }
  func.func @transform_5(%arg0: i32, %arg1: i32) -> (i32, i32) {
    %c0_i32 = arith.constant 0 : i32
    %c0_i32_0 = arith.constant 0 : i32
    %c0_i32_1 = arith.constant 0 : i32
    return %c0_i32, %c0_i32_0 : i32, i32
  }
  func.func @transform_6(%arg0: i32, %arg1: i32) -> (i32, i32) {
    %c0_i32 = arith.constant 0 : i32
    %c0_i32_0 = arith.constant 0 : i32
    %c0_i32_1 = arith.constant 0 : i32
    return %c0_i32, %c0_i32_0 : i32, i32
  }
  func.func @transform_7(%arg0: i32, %arg1: i32) -> (i32, i32) {
    %c0_i32 = arith.constant 0 : i32
    %c0_i32_0 = arith.constant 0 : i32
    return %arg0, %c0_i32 : i32, i32
  }
}

</mosaic_0001>

<llo_original>
// kernel: tpu_custom_call.1
$region0: #{tpu_custom_call.1}
  #allocation0 [shape = 'u32[]', space=smem, size = 0x4, offset = 0x4, fixed_abs, tag = 'smem constant byte address 0x4 - core index']
  #allocation1 [shape = 'u32[144,128]{1,0:T(1,128)}', space=vmem, size = 0x12000, scoped, tag = 'internal scratch']
  #allocation2 [shape = 'f32[2,128]{1,0:T(2,128)}', space=vmem, size = 0x400, scoped, tag = 'scratch operand']
  %s0 = inlined_call_operand.vmem [shape: f32[2,2,128], index: 0, kind: input, shape index: {}]
  %s1 = inlined_call_operand.vmem [shape: f32[2,4], index: 1, kind: input, shape index: {}]
  %s2 = inlined_call_operand.vmem [shape: f32[128,16], index: 2, kind: input, shape index: {}]
  %s3 = inlined_call_operand.vmem [shape: f32[4,16], index: 3, kind: input, shape index: {}]
  %s4 = inlined_call_operand.vmem [shape: f32[1,16], index: 4, kind: input, shape index: {}]
  %s5 = inlined_call_operand.vmem [shape: f32[16,4], index: 5, kind: input, shape index: {}]
  %s6 = inlined_call_operand.vmem [shape: f32[1,4], index: 6, kind: input, shape index: {}]
  %s7 = inlined_call_operand.hbm [shape: f32[2,4], index: 7, kind: output, shape index: {}]
  %s8 = sld [smem:[#allocation0]]
  $region46: #{tpu_custom_call.1} parent=0
    _
  %s10 = ssub.s32 1, %s8
  %s11 = scalar_select 0, %s10, %s8
  $region1: #{tpu_custom_call.1} parent=0
    #allocation3 [shape = 'u8[1024]{0}', space=vmem, size = 0x400, scoped, tag = 'output window, operand 0, single buffered']
    #allocation4 [shape = 's32[1]{0}', space=sflag, size = 0x4, scoped, tag = 'scoped memory for tpu_custom_call.1']
    %12 = vsyncpa [#allocation4], 0
    // Predicated region
    $region2: #{tpu_custom_call.1} parent=1 // pred_check
      _
    $region3: #{tpu_custom_call.1} parent=1 // pred_check_branch
      %14 = sbr.rel (0) target = $region5
    $region4: #{tpu_custom_call.1} parent=1 // pred_region
      _
    $region5: #{tpu_custom_call.1} parent=1 // pred_fallthru
      _
    // Predicated region
    $region6: #{tpu_custom_call.1} parent=1 // pred_check
      _
    $region7: #{tpu_custom_call.1} parent=1 // pred_check_branch
      %16 = sbr.rel (0) target = $region9
    $region8: #{tpu_custom_call.1} parent=1 // pred_region
      _
    $region9: #{tpu_custom_call.1} parent=1 // pred_fallthru
      _
    // Predicated region
    $region10: #{tpu_custom_call.1} parent=1 // pred_check
      _
    $region11: #{tpu_custom_call.1} parent=1 // pred_check_branch
      %18 = sbr.rel (0) target = $region13
    $region12: #{tpu_custom_call.1} parent=1 // pred_region
      _
    $region13: #{tpu_custom_call.1} parent=1 // pred_fallthru
      _
    // Predicated region
    $region14: #{tpu_custom_call.1} parent=1 // pred_check
      _
    $region15: #{tpu_custom_call.1} parent=1 // pred_check_branch
      %20 = sbr.rel (0) target = $region17
    $region16: #{tpu_custom_call.1} parent=1 // pred_region
      _
    $region17: #{tpu_custom_call.1} parent=1 // pred_fallthru
      _
    // Predicated region
    $region18: #{tpu_custom_call.1} parent=1 // pred_check
      _
    $region19: #{tpu_custom_call.1} parent=1 // pred_check_branch
      %22 = sbr.rel (0) target = $region21
    $region20: #{tpu_custom_call.1} parent=1 // pred_region
      _
    $region21: #{tpu_custom_call.1} parent=1 // pred_fallthru
      _
    // Predicated region
    $region22: #{tpu_custom_call.1} parent=1 // pred_check
      _
    $region23: #{tpu_custom_call.1} parent=1 // pred_check_branch
      %24 = sbr.rel (0) target = $region25
    $region24: #{tpu_custom_call.1} parent=1 // pred_region
      _
    $region25: #{tpu_custom_call.1} parent=1 // pred_fallthru
      _
    // Predicated region
    $region26: #{tpu_custom_call.1} parent=1 // pred_check
      _
    $region27: #{tpu_custom_call.1} parent=1 // pred_check_branch
      %26 = sbr.rel (0) target = $region29
    $region28: #{tpu_custom_call.1} parent=1 // pred_region
      _
    $region29: #{tpu_custom_call.1} parent=1 // pred_fallthru
      _
    %p27 = scmp.eq.s32.totalorder 0, 0
    // Predicated region
    $region30: #{tpu_custom_call.1} parent=1 // pred_check
      %p28 = pneg %p27
    $region31: #{tpu_custom_call.1} parent=1 // pred_check_branch
      %30 = sbr.rel (%p28) target = $region33
    $region32: #{tpu_custom_call.1} parent=1 // pred_region
      %31 = vst [vmem:[#allocation2] sm:$0x3] 0.0
    $region33: #{tpu_custom_call.1} parent=1 // pred_fallthru
      _
    %v32 = vld [vmem:[#allocation2] sm:$0x3]
    %v33 = vld [vmem:[%s0] sm:$0x3]
    %v34 = vld [vmem:[%s0 + $0x2] sm:$0x3]
    %vm35 = vcmask 1041408
    %v36 = vsel %vm35, %v33, 0.0
    %v37 = vrot.slane %v36, 4
    %v38 = vadd.f32 %v36, %v37
    %v39 = vrot.slane %v38, 2
    %v40 = vadd.f32 %v38, %v39
    %v41 = vrot.slane %v40, 1
    %v42 = vadd.f32 %v40, %v41
    %v43 = vsel %vm35, %v34, 0.0
    %v44 = vrot.slane %v43, 4
    %v45 = vadd.f32 %v43, %v44
    %v46 = vrot.slane %v45, 2
    %v47 = vadd.f32 %v45, %v46
    %v48 = vrot.slane %v47, 1
    %v49 = vadd.f32 %v47, %v48
    %vm52 = vcmask 1041409
    %v53 = vsel %vm52, %v49, %v42
    %v55 = vadd.f32 %v32, %v53
    %56 = vst [vmem:[#allocation2] sm:$0x3] %v55
    // Predicated region
    $region34: #{tpu_custom_call.1} parent=1 // pred_check
      %p57 = pneg %p27
    $region35: #{tpu_custom_call.1} parent=1 // pred_check_branch
      %59 = sbr.rel (%p57) target = $region37
    $region36: #{tpu_custom_call.1} parent=1 // pred_region
      %v60 = vld [vmem:[%s1] sm:$0x3]
      %v61 = vld [vmem:[#allocation2] sm:$0x3]
      %v62 = vld [vmem:[%s2] sm:$0xff]
      %v63 = vld [vmem:[%s2 + $0x8] sm:$0xff]
      %v64 = vld [vmem:[%s2 + $0x10] sm:$0xff]
      %v65 = vld [vmem:[%s2 + $0x18] sm:$0xff]
      %v66 = vld [vmem:[%s2 + $0x20] sm:$0xff]
      %v67 = vld [vmem:[%s2 + $0x28] sm:$0xff]
      %v68 = vld [vmem:[%s2 + $0x30] sm:$0xff]
      %v69 = vld [vmem:[%s2 + $0x38] sm:$0xff]
      %v70 = vld [vmem:[%s2 + $0x40] sm:$0xff]
      %v71 = vld [vmem:[%s2 + $0x48] sm:$0xff]
      %v72 = vld [vmem:[%s2 + $0x50] sm:$0xff]
      %v73 = vld [vmem:[%s2 + $0x58] sm:$0xff]
      %v74 = vld [vmem:[%s2 + $0x60] sm:$0xff]
      %v75 = vld [vmem:[%s2 + $0x68] sm:$0xff]
      %v76 = vld [vmem:[%s2 + $0x70] sm:$0xff]
      %v77 = vld [vmem:[%s2 + $0x78] sm:$0xff]
      %78 = vmatprep.subr.mxu0 0.0
      %79 = vmatpush1.msra.mxu0 %v62
      %80 = vmatprep.subr.mxu0 0.0
      %81 = vmatpush1.msra.mxu0 %v63
      %82 = vmatprep.subr.mxu0 0.0
      %83 = vmatpush1.msra.mxu0 %v64
      %84 = vmatprep.subr.mxu0 0.0
      %85 = vmatpush1.msra.mxu0 %v65
      %86 = vmatprep.subr.mxu0 0.0
      %87 = vmatpush1.msra.mxu0 %v66
      %88 = vmatprep.subr.mxu0 0.0
      %89 = vmatpush1.msra.mxu0 %v67
      %90 = vmatprep.subr.mxu0 0.0
      %91 = vmatpush1.msra.mxu0 %v68
      %92 = vmatprep.subr.mxu0 0.0
      %93 = vmatpush1.msra.mxu0 %v69
      %94 = vmatprep.subr.mxu0 0.0
      %95 = vmatpush1.msra.mxu0 %v70
      %96 = vmatprep.subr.mxu0 0.0
      %97 = vmatpush1.msra.mxu0 %v71
      %98 = vmatprep.subr.mxu0 0.0
      %99 = vmatpush1.msra.mxu0 %v72
      %100 = vmatprep.subr.mxu0 0.0
      %101 = vmatpush1.msra.mxu0 %v73
      %102 = vmatprep.subr.mxu0 0.0
      %103 = vmatpush1.msra.mxu0 %v74
      %104 = vmatprep.subr.mxu0 0.0
      %105 = vmatpush1.msra.mxu0 %v75
      %106 = vmatprep.subr.mxu0 0.0
      %107 = vmatpush1.msra.mxu0 %v76
      %108 = vmatprep.subr.mxu0 0.0
      %109 = vmatpush1.msra.mxu0 %v77
      %110 = vmatprep.subr.mxu0 0.0
      %111 = vmatpush1.msra.mxu0 0.0
      %112 = vmatprep.subr.mxu0 0.0
      %113 = vmatpush1.msra.mxu0 0.0
      %114 = vmatprep.subr.mxu0 0.0
      %115 = vmatpush1.msra.mxu0 0.0
      %116 = vmatprep.subr.mxu0 0.0
      %117 = vmatpush1.msra.mxu0 0.0
      %118 = vmatprep.subr.mxu0 0.0
      %119 = vmatpush1.msra.mxu0 0.0
      %120 = vmatprep.subr.mxu0 0.0
      %121 = vmatpush1.msra.mxu0 0.0
      %122 = vmatprep.subr.mxu0 0.0
      %123 = vmatpush1.msra.mxu0 0.0
      %124 = vmatprep.subr.mxu0 0.0
      %125 = vmatpush1.msra.mxu0 0.0
      %126 = vmatprep.subr.mxu0 0.0
      %127 = vmatpush1.msra.mxu0 0.0
      %128 = vmatprep.subr.mxu0 0.0
      %129 = vmatpush1.msra.mxu0 0.0
      %130 = vmatprep.subr.mxu0 0.0
      %131 = vmatpush1.msra.mxu0 0.0
      %132 = vmatprep.subr.mxu0 0.0
      %133 = vmatpush1.msra.mxu0 0.0
      %134 = vmatprep.subr.mxu0 0.0
      %135 = vmatpush1.msra.mxu0 0.0
      %136 = vmatprep.subr.mxu0 0.0
      %137 = vmatpush1.msra.mxu0 0.0
      %138 = vmatprep.subr.mxu0 0.0
      %139 = vmatpush1.msra.mxu0 0.0
      %140 = vmatprep.subr.mxu0 0.0
      %141 = vmatpush1.msra.mxu0 0.0
      %142 = vmatprep.mubr.f32.mxu0 0.0
      %143 = vmatmul.mubr.f32.gmra.mrb[0].mxu0 %v61
      %v144 = vpop.f32.mrb[0].mxu0
      %v145 = vadd.f32 0.0, %v144
      %v146 = vpop.f32.mrb[0].mxu0
      %147 = vdwg.mxu0
      %v148 = vmul.f32 %v145, 0.125
      %v149 = vld [vmem:[%s4] sm:$0x1]
      %v151 = vlaneseq
      %v152 = vshrl.u32 %v151, 7
      %v153 = vsub.s32 0, %v152
      %v154 = vrot.slane %v149, %v153
      %v156 = vadd.f32 %v148, %v154
      %v157 = vld [vmem:[%s3] sm:$0x1]
      %159 = vset.pattern.permute.xlu0 0
      %160 = vperm.xlu0 %159, %v60
      %v161 = vpop.permute.xlu0 %160
      %v163 = vlaneseq
      %v164 = vshrl.u32 %v163, 7
      %v165 = vsub.s32 0, %v164
      %v166 = vrot.slane %v157, %v165
      %v167 = vmul.f32 %v161, %v166
      %v168 = vadd.f32 %v156, %v167
      %v169 = vld [vmem:[%s3 + $0x1] sm:$0x1]
      %170 = vset.pattern.permute.xlu0 1
      %171 = vperm.xlu0 %170, %v60
      %v172 = vpop.permute.xlu0 %171
      %v174 = vlaneseq
      %v175 = vshrl.u32 %v174, 7
      %v176 = vsub.s32 0, %v175
      %v177 = vrot.slane %v169, %v176
      %v178 = vmul.f32 %v172, %v177
      %v179 = vadd.f32 %v168, %v178
      %v180 = vld [vmem:[%s3 + $0x2] sm:$0x1]
      %181 = vset.pattern.permute.xlu0 2
      %182 = vperm.xlu0 %181, %v60
      %v183 = vpop.permute.xlu0 %182
      %v185 = vlaneseq
      %v186 = vshrl.u32 %v185, 7
      %v187 = vsub.s32 0, %v186
      %v188 = vrot.slane %v180, %v187
      %v189 = vmul.f32 %v183, %v188
      %v190 = vadd.f32 %v179, %v189
      %v191 = vld [vmem:[%s3 + $0x3] sm:$0x1]
      %192 = vset.pattern.permute.xlu0 3
      %193 = vperm.xlu0 %192, %v60
      %v194 = vpop.permute.xlu0 %193
      %v196 = vlaneseq
      %v197 = vshrl.u32 %v196, 7
      %v198 = vsub.s32 0, %v197
      %v199 = vrot.slane %v191, %v198
      %v200 = vmul.f32 %v194, %v199
      %v201 = vadd.f32 %v190, %v200
      %v202 = vmax.f32 %v201, 0.0
      %v203 = vld [vmem:[%s5] sm:$0xff]
      %v204 = vld [vmem:[%s5 + $0x8] sm:$0xff]
      %v205 = vld [vmem:[%s6] sm:$0x1]
      %v207 = vlaneseq
      %v208 = vshrl.u32 %v207, 7
      %v209 = vsub.s32 0, %v208
      %v210 = vrot.slane %v205, %v209
      %vm212 = vcmask 130048
      %v214 = vsel %vm212, %v202, 0
      %216 = vmatprep.subr.mxu0 0.0
      %217 = vmatpush1.msra.mxu0 %v203
      %218 = vmatprep.subr.mxu0 0.0
      %219 = vmatpush1.msra.mxu0 %v204
      %220 = vmatprep.subr.mxu0 0.0
      %221 = vmatpush1.msra.mxu0 0.0
      %222 = vmatprep.subr.mxu0 0.0
      %223 = vmatpush1.msra.mxu0 0.0
      %224 = vmatprep.subr.mxu0 0.0
      %225 = vmatpush1.msra.mxu0 0.0
      %226 = vmatprep.subr.mxu0 0.0
      %227 = vmatpush1.msra.mxu0 0.0
      %228 = vmatprep.subr.mxu0 0.0
      %229 = vmatpush1.msra.mxu0 0.0
      %230 = vmatprep.subr.mxu0 0.0
      %231 = vmatpush1.msra.mxu0 0.0
      %232 = vmatprep.subr.mxu0 0.0
      %233 = vmatpush1.msra.mxu0 0.0
      %234 = vmatprep.subr.mxu0 0.0
      %235 = vmatpush1.msra.mxu0 0.0
      %236 = vmatprep.subr.mxu0 0.0
      %237 = vmatpush1.msra.mxu0 0.0
      %238 = vmatprep.subr.mxu0 0.0
      %239 = vmatpush1.msra.mxu0 0.0
      %240 = vmatprep.subr.mxu0 0.0
      %241 = vmatpush1.msra.mxu0 0.0
      %242 = vmatprep.subr.mxu0 0.0
      %243 = vmatpush1.msra.mxu0 0.0
      %244 = vmatprep.subr.mxu0 0.0
      %245 = vmatpush1.msra.mxu0 0.0
      %246 = vmatprep.subr.mxu0 0.0
      %247 = vmatpush1.msra.mxu0 0.0
      %248 = vmatprep.subr.mxu0 0.0
      %249 = vmatpush1.msra.mxu0 0.0
      %250 = vmatprep.subr.mxu0 0.0
      %251 = vmatpush1.msra.mxu0 0.0
      %252 = vmatprep.subr.mxu0 0.0
      %253 = vmatpush1.msra.mxu0 0.0
      %254 = vmatprep.subr.mxu0 0.0
      %255 = vmatpush1.msra.mxu0 0.0
      %256 = vmatprep.subr.mxu0 0.0
      %257 = vmatpush1.msra.mxu0 0.0
      %258 = vmatprep.subr.mxu0 0.0
      %259 = vmatpush1.msra.mxu0 0.0
      %260 = vmatprep.subr.mxu0 0.0
      %261 = vmatpush1.msra.mxu0 0.0
      %262 = vmatprep.subr.mxu0 0.0
      %263 = vmatpush1.msra.mxu0 0.0
      %264 = vmatprep.subr.mxu0 0.0
      %265 = vmatpush1.msra.mxu0 0.0
      %266 = vmatprep.subr.mxu0 0.0
      %267 = vmatpush1.msra.mxu0 0.0
      %268 = vmatprep.subr.mxu0 0.0
      %269 = vmatpush1.msra.mxu0 0.0
      %270 = vmatprep.subr.mxu0 0.0
      %271 = vmatpush1.msra.mxu0 0.0
      %272 = vmatprep.subr.mxu0 0.0
      %273 = vmatpush1.msra.mxu0 0.0
      %274 = vmatprep.subr.mxu0 0.0
      %275 = vmatpush1.msra.mxu0 0.0
      %276 = vmatprep.subr.mxu0 0.0
      %277 = vmatpush1.msra.mxu0 0.0
      %278 = vmatprep.subr.mxu0 0.0
      %279 = vmatpush1.msra.mxu0 0.0
      %280 = vmatprep.mubr.f32.mxu0 0.0
      %281 = vmatmul.mubr.f32.gmra.mrb[0].mxu0 %v214
      %v282 = vpop.f32.mrb[0].mxu0
      %v283 = vadd.f32 %v210, %v282
      %v284 = vpop.f32.mrb[0].mxu0
      %285 = vdwg.mxu0
      %v286 = vtanh.pop %v283
      %v287 = vmul.f32 %v286, 0.1
      %v288 = vadd.f32 %v60, %v287
      %v289 = vxor.u32 %v288, 2147483648
      %v290 = vmul.f32 %v289, 1.442695
      %v291 = vpow.pop %v290
      %v292 = vadd.f32 %v291, 1.0
      %v293 = vrcp.pop %v292
      %v294 = vmul.f32 1.0, %v293
      %vm295 = vcmask 25600
      %296 = vst.msk [vmem:[#allocation3] sm:$0x3] %vm295, %v294
    $region37: #{tpu_custom_call.1} parent=1 // pred_fallthru
      _
    // Predicated region
    $region38: #{tpu_custom_call.1} parent=1 // pred_check
      _
    $region39: #{tpu_custom_call.1} parent=1 // pred_check_branch
      %298 = sbr.rel (0) target = $region41
    $region40: #{tpu_custom_call.1} parent=1 // pred_region
      %s300 = ssub.s32 32, 32
      %301 = vsyncadd [#allocation4], %s300
      %s303 = sshll.u32 [#allocation3], 4
      %s304 = int_to_ptr.vmem [resolvable:$true] %s303
      %306 = dma.vmem_to_hbm [thread:$0]  %s304, 32, %s7, [#allocation4]
    $region41: #{tpu_custom_call.1} parent=1 // pred_fallthru
      _
    // Predicated region
    $region42: #{tpu_custom_call.1} parent=1 // pred_check
      _
    $region43: #{tpu_custom_call.1} parent=1 // pred_check_branch
      %308 = sbr.rel (0) target = $region45
    $region44: #{tpu_custom_call.1} parent=1 // pred_region
      %309 = dma.done [#allocation4], 32
    $region45: #{tpu_custom_call.1} parent=1 // pred_fallthru
      _
    %310 = vsyncpa [#allocation4], 1

</llo_original>
